<compile_context>
chip_gen: v5e
topology: v5e:2x2
jax: 0.10.0
libtpu: 0.0.40
codegen_flags: <defaults>
</compile_context>

<pallas_src>
import jax
import jax.numpy as jnp
from jax.experimental import pallas as pl
from jax.experimental.pallas import tpu as pltpu

INPUT_DIM = 512
HIDDEN_DIM = 128
OUTPUT_DIM = 30


def mlp_kernel(x_ref, w1_ref, b1_ref, w2_ref, b2_ref, o_ref):
    # In-kernel f32 -> bf16 cast of the activation tile (no extra HBM pass).
    x = x_ref[...].astype(w1_ref.dtype)
    # First linear: bf16 operands, f32 accumulation on the MXU; bias + ReLU in f32.
    h = jnp.dot(x, w1_ref[...], preferred_element_type=jnp.float32)
    h = jnp.maximum(h + b1_ref[...], 0.0)                  # (bm, H) + (1, H), VPU
    # Second linear: bf16 LHS, f32 accumulation.
    o = jnp.dot(h.astype(w2_ref.dtype), w2_ref[...],
                preferred_element_type=jnp.float32)
    o_ref[...] = (o + b2_ref[...]).astype(o_ref.dtype)     # (bm, O) + (1, O)


def _round_up(x, m):
    return ((x + m - 1) // m) * m


def mlp_forward(x, w1, b1, w2, b2, *, block_m=2048):
    """Fused MLP forward.

    x : (B, D) float32
    w1: (D, H) bfloat16 (transpose of PyTorch nn.Linear weight)
    b1: (1, H) float32
    w2: (H, O) bfloat16
    b2: (1, O) float32
    Returns (B, O) float32 logits.
    """
    B, D = x.shape
    H = w1.shape[1]
    O = w2.shape[1]

    # Trace-time dtype guards (no-ops when params were prepared once up front).
    if w1.dtype != jnp.bfloat16:
        w1 = w1.astype(jnp.bfloat16)
    if w2.dtype != jnp.bfloat16:
        w2 = w2.astype(jnp.bfloat16)
    if b1.dtype != jnp.float32:
        b1 = b1.astype(jnp.float32)
    if b2.dtype != jnp.float32:
        b2 = b2.astype(jnp.float32)

    # Batch tiling: sublane-aligned block, no padding of x (ragged last block is
    # handled by Pallas).  Guarantee >= 2 grid steps when the batch allows it so
    # the "parallel" axis shards across both TensorCores on v7x.
    bm = min(block_m, _round_up(B, 8))
    if B >= 16 and pl.cdiv(B, bm) < 2:
        bm = _round_up(pl.cdiv(B, 2), 8)
    grid = (pl.cdiv(B, bm),)

    return pl.pallas_call(
        mlp_kernel,
        out_shape=jax.ShapeDtypeStruct((B, O), jnp.float32),
        grid=grid,
        in_specs=[
            pl.BlockSpec((bm, D), lambda i: (i, 0)),   # x tile (f32, streamed)
            pl.BlockSpec((D, H), lambda i: (0, 0)),    # W1 bf16 (VMEM-resident)
            pl.BlockSpec((1, H), lambda i: (0, 0)),    # b1 f32
            pl.BlockSpec((H, O), lambda i: (0, 0)),    # W2 bf16 (VMEM-resident)
            pl.BlockSpec((1, O), lambda i: (0, 0)),    # b2 f32
        ],
        out_specs=pl.BlockSpec((bm, O), lambda i: (i, 0)),  # unpadded (bm, 30)
        compiler_params=pltpu.CompilerParams(
            dimension_semantics=("parallel",),
            vmem_limit_bytes=32 * 1024 * 1024,
        ),
    )(x, w1, b1, w2, b2)


def init_params(key, input_dim=INPUT_DIM, hidden_dim=HIDDEN_DIM,
                output_dim=OUTPUT_DIM, dtype=jnp.float32):
    # Deterministic init mimicking nn.Linear's uniform(-1/sqrt(fan_in), 1/sqrt(fan_in)).
    k1, k2, k3, k4 = jax.random.split(key, 4)
    bound1 = 1.0 / jnp.sqrt(input_dim)
    bound2 = 1.0 / jnp.sqrt(hidden_dim)
    w1 = jax.random.uniform(k1, (input_dim, hidden_dim), dtype, -bound1, bound1)
    b1 = jax.random.uniform(k2, (1, hidden_dim), dtype, -bound1, bound1)
    w2 = jax.random.uniform(k3, (hidden_dim, output_dim), dtype, -bound2, bound2)
    b2 = jax.random.uniform(k4, (1, output_dim), dtype, -bound2, bound2)
    return w1, b1, w2, b2


def prepare_params(w1, b1, w2, b2):
    """One-time conversion to kernel-ready dtypes (bf16 weights, f32 biases)."""
    return (w1.astype(jnp.bfloat16), b1.astype(jnp.float32),
            w2.astype(jnp.bfloat16), b2.astype(jnp.float32))


if __name__ == "__main__":
    key = jax.random.PRNGKey(0)
    kx, kp = jax.random.split(key)

    # Small demo batch; deliberately not a multiple of 8 or of the block size so
    # the ragged-last-block path (masked writeback) is exercised.
    batch = 50
    x = jax.random.normal(kx, (batch, INPUT_DIM), jnp.float32)
    w1, b1, w2, b2 = init_params(kp)                      # f32 master params
    kw1, kb1, kw2, kb2 = prepare_params(w1, b1, w2, b2)   # bf16/f32 kernel params

    fwd = jax.jit(mlp_forward)
    out = fwd(x, kw1, kb1, kw2, kb2)
    out = jax.block_until_ready(out)
    assert out.shape == (batch, OUTPUT_DIM)
    assert out.dtype == jnp.float32

    # Reference with matched precision (bf16 operands, f32 accumulation).
    xb = x.astype(jnp.bfloat16)
    h_ref = jnp.maximum(
        jnp.dot(xb, kw1, preferred_element_type=jnp.float32) + kb1, 0.0)
    ref = jnp.dot(h_ref.astype(jnp.bfloat16), kw2,
                  preferred_element_type=jnp.float32) + kb2
    assert jnp.allclose(out, ref, atol=2e-3, rtol=2e-3)

    # Loose sanity check against the pure-f32 PyTorch-equivalent forward.
    ref_f32 = jnp.maximum(x @ w1 + b1, 0.0) @ w2 + b2
    assert jnp.allclose(out, ref_f32, atol=1e-1, rtol=1e-1)

    print("KERNEL_OK")
</pallas_src>

<mosaic_0001>
module attributes {stable_mosaic.version = 11 : i64} {
  func.func @mlp_kernel(%arg0: i32, %arg1: memref<32x512xf32, #tpu.memory_space<vmem>>, %arg2: memref<512x128xbf16, #tpu.memory_space<vmem>>, %arg3: memref<1x128xf32, #tpu.memory_space<vmem>>, %arg4: memref<128x30xbf16, #tpu.memory_space<vmem>>, %arg5: memref<1x30xf32, #tpu.memory_space<vmem>>, %arg6: memref<32x30xf32, #tpu.memory_space<vmem>>) attributes {dimension_semantics = [#tpu.dimension_semantics<parallel>], iteration_bounds = array<i64: 2>, scalar_prefetch = 0 : i64, scratch_operands = 0 : i64, tpu.core_type = #tpu.core_type<tc>, window_params = [{transform_indices = @transform_0, window_bounds = array<i64: 32, 512>}, {pipeline_mode = #tpu.pipeline_mode<synchronous>, transform_indices = @transform_1, window_bounds = array<i64: 512, 128>}, {pipeline_mode = #tpu.pipeline_mode<synchronous>, transform_indices = @transform_2, window_bounds = array<i64: 1, 128>}, {pipeline_mode = #tpu.pipeline_mode<synchronous>, transform_indices = @transform_3, window_bounds = array<i64: 128, 30>}, {pipeline_mode = #tpu.pipeline_mode<synchronous>, transform_indices = @transform_4, window_bounds = array<i64: 1, 30>}, {transform_indices = @transform_5, window_bounds = array<i64: 32, 30>}]} {
    %c0 = arith.constant 0 : index
    %c0_0 = arith.constant 0 : index
    %0 = vector.load %arg1[%c0, %c0_0] : memref<32x512xf32, #tpu.memory_space<vmem>>, vector<32x512xf32>
    %1 = arith.truncf %0 : vector<32x512xf32> to vector<32x512xbf16>
    %c0_1 = arith.constant 0 : index
    %c0_2 = arith.constant 0 : index
    %2 = vector.load %arg2[%c0_1, %c0_2] : memref<512x128xbf16, #tpu.memory_space<vmem>>, vector<512x128xbf16>
    %cst = arith.constant dense<0.000000e+00> : vector<32x128xf32>
    %3 = tpu.matmul %1, %2, %cst {dimension_numbers = #tpu.dot_dimension_numbers<[1], [0], [0], [1], [0, 0, 1, 1], [], []>} : vector<32x512xbf16>, vector<512x128xbf16>, vector<32x128xf32> -> vector<32x128xf32>
    %c0_3 = arith.constant 0 : index
    %c0_4 = arith.constant 0 : index
    %4 = vector.load %arg3[%c0_3, %c0_4] : memref<1x128xf32, #tpu.memory_space<vmem>>, vector<1x128xf32>
    %5 = vector.broadcast %4 : vector<1x128xf32> to vector<32x128xf32>
    %6 = arith.addf %3, %5 : vector<32x128xf32>
    %cst_5 = arith.constant 0.000000e+00 : f32
    %7 = vector.broadcast %cst_5 : f32 to vector<32x128xf32>
    %8 = arith.maximumf %6, %7 : vector<32x128xf32>
    %9 = arith.truncf %8 : vector<32x128xf32> to vector<32x128xbf16>
    %c0_6 = arith.constant 0 : index
    %c0_7 = arith.constant 0 : index
    %10 = vector.load %arg4[%c0_6, %c0_7] : memref<128x30xbf16, #tpu.memory_space<vmem>>, vector<128x30xbf16>
    %cst_8 = arith.constant dense<0.000000e+00> : vector<32x30xf32>
    %11 = tpu.matmul %9, %10, %cst_8 {dimension_numbers = #tpu.dot_dimension_numbers<[1], [0], [0], [1], [0, 0, 1, 1], [], []>} : vector<32x128xbf16>, vector<128x30xbf16>, vector<32x30xf32> -> vector<32x30xf32>
    %c0_9 = arith.constant 0 : index
    %c0_10 = arith.constant 0 : index
    %12 = vector.load %arg5[%c0_9, %c0_10] : memref<1x30xf32, #tpu.memory_space<vmem>>, vector<1x30xf32>
    %13 = vector.broadcast %12 : vector<1x30xf32> to vector<32x30xf32>
    %14 = arith.addf %11, %13 : vector<32x30xf32>
    %c0_11 = arith.constant 0 : index
    %c0_12 = arith.constant 0 : index
    %15 = vector.load %arg6[%c0_11, %c0_12] : memref<32x30xf32, #tpu.memory_space<vmem>>, vector<32x30xf32>
    tpu.vector_store %arg6[%c0_11, %c0_12], %14 {strides = array<i32>} : memref<32x30xf32, #tpu.memory_space<vmem>>, vector<32x30xf32>,
    return
  }
  func.func @transform_0(%arg0: i32) -> (i32, i32) {
    %c0_i32 = arith.constant 0 : i32
    %c0_i32_0 = arith.constant 0 : i32
    return %arg0, %c0_i32 : i32, i32
  }
  func.func @transform_1(%arg0: i32) -> (i32, i32) {
    %c0_i32 = arith.constant 0 : i32
    %c0_i32_0 = arith.constant 0 : i32
    %c0_i32_1 = arith.constant 0 : i32
    return %c0_i32, %c0_i32_0 : i32, i32
  }
  func.func @transform_2(%arg0: i32) -> (i32, i32) {
    %c0_i32 = arith.constant 0 : i32
    %c0_i32_0 = arith.constant 0 : i32
    %c0_i32_1 = arith.constant 0 : i32
    return %c0_i32, %c0_i32_0 : i32, i32
  }
  func.func @transform_3(%arg0: i32) -> (i32, i32) {
    %c0_i32 = arith.constant 0 : i32
    %c0_i32_0 = arith.constant 0 : i32
    %c0_i32_1 = arith.constant 0 : i32
    return %c0_i32, %c0_i32_0 : i32, i32
  }
  func.func @transform_4(%arg0: i32) -> (i32, i32) {
    %c0_i32 = arith.constant 0 : i32
    %c0_i32_0 = arith.constant 0 : i32
    %c0_i32_1 = arith.constant 0 : i32
    return %c0_i32, %c0_i32_0 : i32, i32
  }
  func.func @transform_5(%arg0: i32) -> (i32, i32) {
    %c0_i32 = arith.constant 0 : i32
    %c0_i32_0 = arith.constant 0 : i32
    return %arg0, %c0_i32 : i32, i32
  }
}

</mosaic_0001>

<llo_original>
// kernel: mlp_forward.1
$region0: #{mlp_forward.1}
  #allocation0 [shape = 'u32[]', space=smem, size = 0x4, offset = 0x4, fixed_abs, tag = 'smem constant byte address 0x4 - core index']
  #allocation1 [shape = 'u32[72,128]{1,0:T(1,128)}', space=vmem, size = 0x9000, scoped, tag = 'internal scratch']
  %s0 = inlined_call_operand.hbm [shape: f32[50,512], index: 0, kind: input, shape index: {}]
  %s1 = inlined_call_operand.hbm [shape: bf16[512,128], index: 1, kind: input, shape index: {}]
  %s2 = inlined_call_operand.vmem [shape: f32[1,128], index: 2, kind: input, shape index: {}]
  %s3 = inlined_call_operand.vmem [shape: bf16[128,30], index: 3, kind: input, shape index: {}]
  %s4 = inlined_call_operand.vmem [shape: f32[1,30], index: 4, kind: input, shape index: {}]
  %s5 = inlined_call_operand.vmem [shape: f32[50,30], index: 5, kind: output, shape index: {}]
  %s6 = sld [smem:[#allocation0]]
  $region109: #{mlp_forward.1} parent=0
    _
  %s8 = ssub.s32 1, %s6
  %s9 = scalar_select 0, %s8, %s6
  $region1: #{mlp_forward.1} parent=0
    #allocation2 [shape = 'u8[131072]{0}', space=vmem, size = 0x20000, scoped, tag = 'input window, operand 0']
    #allocation3 [shape = 's32[2]{0}', space=sflag, size = 0x8, scoped, tag = 'scoped memory for mlp_forward.1']
    #allocation4 [shape = 'u8[131072]{0}', space=vmem, size = 0x20000, scoped, tag = 'input window, operand 1, single buffered']
    #allocation5 [shape = 's32[1]{0}', space=sflag, size = 0x4, scoped, tag = 'scoped memory for mlp_forward.1']
    #allocation6 [shape = 'u8[32768]{0}', space=vmem, size = 0x8000, scoped, tag = 'output window, operand 0']
    %10 = vsyncpa [#allocation3], 0
    %s11 = scalar_lea.sflag [#allocation3], 1
    %12 = vsyncpa %s11, 0
    %13 = vsyncpa [#allocation5], 0
    loop: start=0, step=1, limit=4
    $region2: #{mlp_forward.1} parent=1 // loop_pre_header
      _
    $region3: #{mlp_forward.1} parent=1 // loop_header
      %s15 = sphi 0, %s19
      %p16 = scmp.ge.s32.totalorder %s15, 4
      %s25 = sphi 0, %s27
      %s28 = sphi 0, %s25
      %s29 = sphi 0, %s28
      %s45 = sphi 0, %s29
      %s49 = sphi 0, %s49
      %s51 = sphi 0, %s49
      %s52 = sphi 0, %s51
      %s66 = sphi 0, %s52
      %s70 = sphi 0, %s70
      %s72 = sphi 0, %s70
      %s73 = sphi 0, %s72
      %s87 = sphi 0, %s73
      %s91 = sphi 0, %s91
      %s93 = sphi 0, %s91
      %s94 = sphi 0, %s93
      %s108 = sphi 0, %s94
      %s112 = sphi 0, %s112
      %s114 = sphi 0, %s112
      %s115 = sphi 0, %s114
      %s129 = sphi 0, %s115
      %s135 = sphi 0, %s137
      %s138 = sphi 0, %s135
      %s139 = sphi 0, %s138
      %s155 = sphi 0, %s139
    $region4: #{mlp_forward.1} parent=1 // loop_header_branch
      %18 = sbr.rel (%p16) target = $region8
    $region5: #{mlp_forward.1} parent=1 // loop_body
      %s20 = ssub.s32 %s15, 1
      %s21 = ssub.s32 %s15, 2
      %s22 = sadd.s32 %s15, 1
      %s23 = ssub.s32 %s15, %s22
      %p24 = scmp.eq.s32.totalorder %s23, 0
      %s26 = sadd.s32 %s25, 1
      %s27 = scalar_select %p24, %s25, %s26
      %p30 = pneg %p24
      %p31 = scmp.eq.s32.totalorder %s15, 1
      %p32 = por %p30, %p31
      %p33 = scmp.ne.s32.totalorder %s25, %s28
      %p34 = scmp.eq.s32.totalorder %s15, 0
      %p35 = por %p33, %p34
      %p36 = scmp.ne.s32.totalorder %s25, %s28
      %p37 = scmp.eq.s32.totalorder %s20, 1
      %p38 = por %p36, %p37
      %p39 = scmp.ne.s32.totalorder %s28, %s29
      %p40 = scmp.eq.s32.totalorder %s20, 0
      %p41 = por %p39, %p40
      %p42 = scmp.ne.s32.totalorder %s28, %s29
      %p43 = scmp.eq.s32.totalorder %s21, 1
      %p44 = por %p42, %p43
      %p46 = scmp.ne.s32.totalorder %s29, %s45
      %p47 = scmp.eq.s32.totalorder %s21, 0
      %p48 = por %p46, %p47
      %s50 = sadd.s32 %s49, 1
      %p53 = scmp.eq.s32.totalorder %s15, 1
      %p54 = scmp.ne.s32.totalorder %s49, %s51
      %p55 = scmp.eq.s32.totalorder %s15, 0
      %p56 = por %p54, %p55
      %p57 = scmp.ne.s32.totalorder %s49, %s51
      %p58 = scmp.eq.s32.totalorder %s20, 1
      %p59 = por %p57, %p58
      %p60 = scmp.ne.s32.totalorder %s51, %s52
      %p61 = scmp.eq.s32.totalorder %s20, 0
      %p62 = por %p60, %p61
      %p63 = scmp.ne.s32.totalorder %s51, %s52
      %p64 = scmp.eq.s32.totalorder %s21, 1
      %p65 = por %p63, %p64
      %p67 = scmp.ne.s32.totalorder %s52, %s66
      %p68 = scmp.eq.s32.totalorder %s21, 0
      %p69 = por %p67, %p68
      %s71 = sadd.s32 %s70, 1
      %p74 = scmp.eq.s32.totalorder %s15, 1
      %p75 = scmp.ne.s32.totalorder %s70, %s72
      %p76 = scmp.eq.s32.totalorder %s15, 0
      %p77 = por %p75, %p76
      %p78 = scmp.ne.s32.totalorder %s70, %s72
      %p79 = scmp.eq.s32.totalorder %s20, 1
      %p80 = por %p78, %p79
      %p81 = scmp.ne.s32.totalorder %s72, %s73
      %p82 = scmp.eq.s32.totalorder %s20, 0
      %p83 = por %p81, %p82
      %p84 = scmp.ne.s32.totalorder %s72, %s73
      %p85 = scmp.eq.s32.totalorder %s21, 1
      %p86 = por %p84, %p85
      %p88 = scmp.ne.s32.totalorder %s73, %s87
      %p89 = scmp.eq.s32.totalorder %s21, 0
      %p90 = por %p88, %p89
      %s92 = sadd.s32 %s91, 1
      %p95 = scmp.eq.s32.totalorder %s15, 1
      %p96 = scmp.ne.s32.totalorder %s91, %s93
      %p97 = scmp.eq.s32.totalorder %s15, 0
      %p98 = por %p96, %p97
      %p99 = scmp.ne.s32.totalorder %s91, %s93
      %p100 = scmp.eq.s32.totalorder %s20, 1
      %p101 = por %p99, %p100
      %p102 = scmp.ne.s32.totalorder %s93, %s94
      %p103 = scmp.eq.s32.totalorder %s20, 0
      %p104 = por %p102, %p103
      %p105 = scmp.ne.s32.totalorder %s93, %s94
      %p106 = scmp.eq.s32.totalorder %s21, 1
      %p107 = por %p105, %p106
      %p109 = scmp.ne.s32.totalorder %s94, %s108
      %p110 = scmp.eq.s32.totalorder %s21, 0
      %p111 = por %p109, %p110
      %s113 = sadd.s32 %s112, 1
      %p116 = scmp.eq.s32.totalorder %s15, 1
      %p117 = scmp.ne.s32.totalorder %s112, %s114
      %p118 = scmp.eq.s32.totalorder %s15, 0
      %p119 = por %p117, %p118
      %p120 = scmp.ne.s32.totalorder %s112, %s114
      %p121 = scmp.eq.s32.totalorder %s20, 1
      %p122 = por %p120, %p121
      %p123 = scmp.ne.s32.totalorder %s114, %s115
      %p124 = scmp.eq.s32.totalorder %s20, 0
      %p125 = por %p123, %p124
      %p126 = scmp.ne.s32.totalorder %s114, %s115
      %p127 = scmp.eq.s32.totalorder %s21, 1
      %p128 = por %p126, %p127
      %p130 = scmp.ne.s32.totalorder %s115, %s129
      %p131 = scmp.eq.s32.totalorder %s21, 0
      %p132 = por %p130, %p131
      %s133 = ssub.s32 %s15, %s22
      %p134 = scmp.eq.s32.totalorder %s133, 0
      %s136 = sadd.s32 %s135, 1
      %s137 = scalar_select %p134, %s135, %s136
      %p140 = pneg %p134
      %p141 = scmp.eq.s32.totalorder %s15, 1
      %p142 = por %p140, %p141
      %p143 = scmp.ne.s32.totalorder %s135, %s138
      %p144 = scmp.eq.s32.totalorder %s15, 0
      %p145 = por %p143, %p144
      %p146 = scmp.ne.s32.totalorder %s135, %s138
      %p147 = scmp.eq.s32.totalorder %s20, 1
      %p148 = por %p146, %p147
      %p149 = scmp.ne.s32.totalorder %s138, %s139
      %p150 = scmp.eq.s32.totalorder %s20, 0
      %p151 = por %p149, %p150
      %p152 = scmp.ne.s32.totalorder %s138, %s139
      %p153 = scmp.eq.s32.totalorder %s21, 1
      %p154 = por %p152, %p153
      %p156 = scmp.ne.s32.totalorder %s139, %s155
      %p157 = scmp.eq.s32.totalorder %s21, 0
      %p158 = por %p156, %p157
      %p159 = scmp.le.s32.totalorder 1, %s15
      %p160 = scmp.lt.s32.totalorder %s15, 3
      %p161 = pnand %p159, %p160
      %p162 = pneg %p161
      // Predicated region
      $region9: #{mlp_forward.1} parent=5 // pred_check
        _
      $region10: #{mlp_forward.1} parent=5 // pred_check_branch
        %164 = sbr.rel (%p161) target = $region12
      $region11: #{mlp_forward.1} parent=5 // pred_region
        %s165 = ssub.s32 %s15, 1
        // Predicated region
        $region13: #{mlp_forward.1} parent=11 // pred_check
          %p166 = pneg %p62
        $region14: #{mlp_forward.1} parent=11 // pred_check_branch
          %168 = sbr.rel (%p166) target = $region16
        $region15: #{mlp_forward.1} parent=11 // pred_region
          %170 = vsyncadd [#allocation5], 0
          %s171 = sshll.u32 %s1, 4
          %s172 = int_to_ptr.hbm [resolvable:$true] %s171
          %s173 = sshll.u32 [#allocation4], 4
          %s174 = int_to_ptr.vmem [resolvable:$true] %s173
          %179 = dma.hbm_to_vmem [thread:$0]  %s172, 4096, %s174, [#allocation5], 64, 64, 4
        $region16: #{mlp_forward.1} parent=11 // pred_fallthru
          _
        // Predicated region
        $region17: #{mlp_forward.1} parent=11 // pred_check
          %p180 = pneg %p83
        $region18: #{mlp_forward.1} parent=11 // pred_check_branch
          %182 = sbr.rel (%p180) target = $region20
        $region19: #{mlp_forward.1} parent=11 // pred_region
          _
        $region20: #{mlp_forward.1} parent=11 // pred_fallthru
          _
        // Predicated region
        $region21: #{mlp_forward.1} parent=11 // pred_check
          %p183 = pneg %p104
        $region22: #{mlp_forward.1} parent=11 // pred_check_branch
          %185 = sbr.rel (%p183) target = $region24
        $region23: #{mlp_forward.1} parent=11 // pred_region
          _
        $region24: #{mlp_forward.1} parent=11 // pred_fallthru
          _
        // Predicated region
        $region25: #{mlp_forward.1} parent=11 // pred_check
          %p186 = pneg %p125
        $region26: #{mlp_forward.1} parent=11 // pred_check_branch
          %188 = sbr.rel (%p186) target = $region28
        $region27: #{mlp_forward.1} parent=11 // pred_region
          _
        $region28: #{mlp_forward.1} parent=11 // pred_fallthru
          _
      $region12: #{mlp_forward.1} parent=5 // pred_fallthru
        _
      %p189 = scmp.lt.s32.totalorder %s15, 2
      // Predicated region
      $region29: #{mlp_forward.1} parent=5 // pred_check
        %p190 = pneg %p189
      $region30: #{mlp_forward.1} parent=5 // pred_check_branch
        %192 = sbr.rel (%p190) target = $region32
      $region31: #{mlp_forward.1} parent=5 // pred_region
        // Predicated region
        $region33: #{mlp_forward.1} parent=31 // pred_check
          %p193 = pneg %p35
        $region34: #{mlp_forward.1} parent=31 // pred_check_branch
          %195 = sbr.rel (%p193) target = $region36
        $region35: #{mlp_forward.1} parent=31 // pred_region
          %s196 = sand.u32 %s25, 1
          %s197 = scalar_lea.sflag [#allocation3], %s196
          %s198 = sand.u32 %s25, 1
          %s199 = smul.addr %s198, 128
          %s200 = scalar_lea.vmem [#allocation2], %s199
          %s201 = smul.u32 4, %s15
          %s202 = ssub.s32 7, %s201
          %p203 = scmp.lt.s32.totalorder %s202, 4
          %s204 = scalar_select %p203, %s202, 4
          %s205 = smul.u32 8, %s204
          %s206 = smul.u32 %s205, 4
          %s207 = ssub.s32 128, %s206
          %s208 = sshll.u32 %s207, 4
          %209 = vsyncadd %s197, %s208
          %p210 = scmp.ne.s32.totalorder 0, %s206
          %s211 = smul.addr %s201, 4
          %s212 = smul.addr %s211, 8
          %s213 = scalar_lea.hbm %s0, %s212
          %s214 = smul.u32 32, %s204
          %s215 = sshll.u32 %s213, 4
          %s216 = int_to_ptr.hbm [resolvable:$true] %s215
          %s217 = sshll.u32 %s200, 4
          %s218 = int_to_ptr.vmem [resolvable:$true] %s217
          %s219 = sshll.u32 %s214, 4
          %223 = dma.hbm_to_vmem [thread:$0]  (%p210), %s216, %s219, %s218, %s197, 512, 512, 32
        $region36: #{mlp_forward.1} parent=31 // pred_fallthru
          _
      $region32: #{mlp_forward.1} parent=5 // pred_fallthru
        _
      %p224 = scmp.le.s32.totalorder 1, %s15
      %p225 = scmp.lt.s32.totalorder %s15, 3
      %p226 = pnand %p224, %p225
      %p227 = pneg %p226
      // Predicated region
      $region37: #{mlp_forward.1} parent=5 // pred_check
        _
      $region38: #{mlp_forward.1} parent=5 // pred_check_branch
        %229 = sbr.rel (%p226) target = $region40
      $region39: #{mlp_forward.1} parent=5 // pred_region
        %s230 = ssub.s32 %s15, 1
        %s231 = sand.u32 %s28, 1
        %s232 = scalar_lea.sflag [#allocation3], %s231
        %s233 = sand.u32 %s28, 1
        %s234 = smul.addr %s233, 128
        %s235 = scalar_lea.vmem [#allocation2], %s234
        // Predicated region
        $region41: #{mlp_forward.1} parent=39 // pred_check
          %p236 = pneg %p41
        $region42: #{mlp_forward.1} parent=39 // pred_check_branch
          %238 = sbr.rel (%p236) target = $region44
        $region43: #{mlp_forward.1} parent=39 // pred_region
          %240 = dma.done %s232, 2048
        $region44: #{mlp_forward.1} parent=39 // pred_fallthru
          _
        // Predicated region
        $region45: #{mlp_forward.1} parent=39 // pred_check
          %p241 = pneg %p62
        $region46: #{mlp_forward.1} parent=39 // pred_check_branch
          %243 = sbr.rel (%p241) target = $region48
        $region47: #{mlp_forward.1} parent=39 // pred_region
          %245 = dma.done [#allocation5], 4096
        $region48: #{mlp_forward.1} parent=39 // pred_fallthru
          _
        %s246 = sand.u32 %s28, 1
        %s247 = scalar_lea.sflag [#allocation3], %s246
        %s248 = sand.u32 %s28, 1
        %s249 = smul.addr %s248, 128
        %s250 = scalar_lea.vmem [#allocation2], %s249
        %p251 = pneg %p41
        %p252 = pneg %p38
        %p253 = pneg %p62
        %p254 = pneg %p59
        %p255 = pneg %p83
        %p256 = pneg %p80
        %p257 = pneg %p104
        %p258 = pneg %p101
        %p259 = pneg %p125
        %p260 = pneg %p122
        %p261 = pneg %p151
        %p262 = pneg %p148
        %s263 = sand.u32 %s138, 1
        %s264 = sand.u32 %s138, 1
        %s265 = smul.addr %s264, 32
        %s266 = scalar_lea.vmem [#allocation6], %s265
        %s267 = smul.u32 4, %s20
        %s268 = ssub.s32 7, %s267
        %p269 = scmp.lt.s32.totalorder %s268, 4
        %s270 = scalar_select %p269, %s268, 4
        %s271 = smul.u32 8, %s270
        %s272 = smul.u32 %s271, 4
        %s273 = smul.u32 4, %s20
        %s274 = ssub.s32 7, %s273
        %p275 = scmp.lt.s32.totalorder %s274, 4
        %s276 = scalar_select %p275, %s274, 4
        %s277 = smul.u32 8, %s276
        %v278 = vld [vmem:[%s235] sm:$0xff]
        %v279 = vld [vmem:[%s235 + $0x8] sm:$0xff]
        %v280 = vld [vmem:[%s235 + $0x10] sm:$0xff]
        %v281 = vld [vmem:[%s235 + $0x18] sm:$0xff]
        %v282 = vld [vmem:[%s235 + $0x20] sm:$0xff]
        %v283 = vld [vmem:[%s235 + $0x28] sm:$0xff]
        %v284 = vld [vmem:[%s235 + $0x30] sm:$0xff]
        %v285 = vld [vmem:[%s235 + $0x38] sm:$0xff]
        %v286 = vld [vmem:[%s235 + $0x40] sm:$0xff]
        %v287 = vld [vmem:[%s235 + $0x48] sm:$0xff]
        %v288 = vld [vmem:[%s235 + $0x50] sm:$0xff]
        %v289 = vld [vmem:[%s235 + $0x58] sm:$0xff]
        %v290 = vld [vmem:[%s235 + $0x60] sm:$0xff]
        %v291 = vld [vmem:[%s235 + $0x68] sm:$0xff]
        %v292 = vld [vmem:[%s235 + $0x70] sm:$0xff]
        %v293 = vld [vmem:[%s235 + $0x78] sm:$0xff]
        %v294 = vpack.c.bf16 %v282, %v278
        %v295 = vpack.c.bf16 %v283, %v279
        %v296 = vpack.c.bf16 %v284, %v280
        %v297 = vpack.c.bf16 %v285, %v281
        %v298 = vpack.c.bf16 %v290, %v286
        %v299 = vpack.c.bf16 %v291, %v287
        %v300 = vpack.c.bf16 %v292, %v288
        %v301 = vpack.c.bf16 %v293, %v289
        %v302 = vld [vmem:[#allocation4] sm:$0xf]
        %v303 = vld [vmem:[#allocation4 + $0x4] sm:$0xf]
        %v304 = vld [vmem:[#allocation4 + $0x8] sm:$0xf]
        %v305 = vld [vmem:[#allocation4 + $0xc] sm:$0xf]
        %v306 = vld [vmem:[#allocation4 + $0x10] sm:$0xf]
        %v307 = vld [vmem:[#allocation4 + $0x14] sm:$0xf]
        %v308 = vld [vmem:[#allocation4 + $0x18] sm:$0xf]
        %v309 = vld [vmem:[#allocation4 + $0x1c] sm:$0xf]
        %v310 = vld [vmem:[#allocation4 + $0x20] sm:$0xf]
        %v311 = vld [vmem:[#allocation4 + $0x24] sm:$0xf]
        %v312 = vld [vmem:[#allocation4 + $0x28] sm:$0xf]
        %v313 = vld [vmem:[#allocation4 + $0x2c] sm:$0xf]
        %v314 = vld [vmem:[#allocation4 + $0x30] sm:$0xf]
        %v315 = vld [vmem:[#allocation4 + $0x34] sm:$0xf]
        %v316 = vld [vmem:[#allocation4 + $0x38] sm:$0xf]
        %v317 = vld [vmem:[#allocation4 + $0x3c] sm:$0xf]
        %v318 = vld [vmem:[#allocation4 + $0x40] sm:$0xf]
        %v319 = vld [vmem:[#allocation4 + $0x44] sm:$0xf]
        %v320 = vld [vmem:[#allocation4 + $0x48] sm:$0xf]
        %v321 = vld [vmem:[#allocation4 + $0x4c] sm:$0xf]
        %v322 = vld [vmem:[#allocation4 + $0x50] sm:$0xf]
        %v323 = vld [vmem:[#allocation4 + $0x54] sm:$0xf]
        %v324 = vld [vmem:[#allocation4 + $0x58] sm:$0xf]
        %v325 = vld [vmem:[#allocation4 + $0x5c] sm:$0xf]
        %v326 = vld [vmem:[#allocation4 + $0x60] sm:$0xf]
        %v327 = vld [vmem:[#allocation4 + $0x64] sm:$0xf]
        %v328 = vld [vmem:[#allocation4 + $0x68] sm:$0xf]
        %v329 = vld [vmem:[#allocation4 + $0x6c] sm:$0xf]
        %v330 = vld [vmem:[#allocation4 + $0x70] sm:$0xf]
        %v331 = vld [vmem:[#allocation4 + $0x74] sm:$0xf]
        %v332 = vld [vmem:[#allocation4 + $0x78] sm:$0xf]
        %v333 = vld [vmem:[#allocation4 + $0x7c] sm:$0xf]
        %v334 = vld [vmem:[#allocation4 + $0x80] sm:$0xf]
        %v335 = vld [vmem:[#allocation4 + $0x84] sm:$0xf]
        %v336 = vld [vmem:[#allocation4 + $0x88] sm:$0xf]
        %v337 = vld [vmem:[#allocation4 + $0x8c] sm:$0xf]
        %v338 = vld [vmem:[#allocation4 + $0x90] sm:$0xf]
        %v339 = vld [vmem:[#allocation4 + $0x94] sm:$0xf]
        %v340 = vld [vmem:[#allocation4 + $0x98] sm:$0xf]
        %v341 = vld [vmem:[#allocation4 + $0x9c] sm:$0xf]
        %v342 = vld [vmem:[#allocation4 + $0xa0] sm:$0xf]
        %v343 = vld [vmem:[#allocation4 + $0xa4] sm:$0xf]
        %v344 = vld [vmem:[#allocation4 + $0xa8] sm:$0xf]
        %v345 = vld [vmem:[#allocation4 + $0xac] sm:$0xf]
        %v346 = vld [vmem:[#allocation4 + $0xb0] sm:$0xf]
        %v347 = vld [vmem:[#allocation4 + $0xb4] sm:$0xf]
        %v348 = vld [vmem:[#allocation4 + $0xb8] sm:$0xf]
        %v349 = vld [vmem:[#allocation4 + $0xbc] sm:$0xf]
        %v350 = vld [vmem:[#allocation4 + $0xc0] sm:$0xf]
        %v351 = vld [vmem:[#allocation4 + $0xc4] sm:$0xf]
        %v352 = vld [vmem:[#allocation4 + $0xc8] sm:$0xf]
        %v353 = vld [vmem:[#allocation4 + $0xcc] sm:$0xf]
        %v354 = vld [vmem:[#allocation4 + $0xd0] sm:$0xf]
        %v355 = vld [vmem:[#allocation4 + $0xd4] sm:$0xf]
        %v356 = vld [vmem:[#allocation4 + $0xd8] sm:$0xf]
        %v357 = vld [vmem:[#allocation4 + $0xdc] sm:$0xf]
        %v358 = vld [vmem:[#allocation4 + $0xe0] sm:$0xf]
        %v359 = vld [vmem:[#allocation4 + $0xe4] sm:$0xf]
        %v360 = vld [vmem:[#allocation4 + $0xe8] sm:$0xf]
        %v361 = vld [vmem:[#allocation4 + $0xec] sm:$0xf]
        %v362 = vld [vmem:[#allocation4 + $0xf0] sm:$0xf]
        %v363 = vld [vmem:[#allocation4 + $0xf4] sm:$0xf]
        %v364 = vld [vmem:[#allocation4 + $0xf8] sm:$0xf]
        %v365 = vld [vmem:[#allocation4 + $0xfc] sm:$0xf]
        %v366 = vld [vmem:[%s2] sm:$0x1]
        %v368 = vperm.slane %v366, 0
        %v434 = vunpack.c.l.b16 %v302
        %v435 = vunpack.c.l.b16 %v303
        %v436 = vunpack.c.l.b16 %v304
        %v437 = vunpack.c.l.b16 %v305
        %v438 = vunpack.c.l.b16 %v306
        %v439 = vunpack.c.l.b16 %v307
        %v440 = vunpack.c.l.b16 %v308
        %v441 = vunpack.c.l.b16 %v309
        %v442 = vunpack.c.l.b16 %v310
        %v443 = vunpack.c.l.b16 %v311
        %v444 = vunpack.c.l.b16 %v312
        %v445 = vunpack.c.l.b16 %v313
        %v446 = vunpack.c.l.b16 %v314
        %v447 = vunpack.c.l.b16 %v315
        %v448 = vunpack.c.l.b16 %v316
        %v449 = vunpack.c.l.b16 %v317
        %v450 = vunpack.c.l.b16 %v318
        %v451 = vunpack.c.l.b16 %v319
        %v452 = vunpack.c.l.b16 %v320
        %v453 = vunpack.c.l.b16 %v321
        %v454 = vunpack.c.l.b16 %v322
        %v455 = vunpack.c.l.b16 %v323
        %v456 = vunpack.c.l.b16 %v324
        %v457 = vunpack.c.l.b16 %v325
        %v458 = vunpack.c.l.b16 %v326
        %v459 = vunpack.c.l.b16 %v327
        %v460 = vunpack.c.l.b16 %v328
        %v461 = vunpack.c.l.b16 %v329
        %v462 = vunpack.c.l.b16 %v330
        %v463 = vunpack.c.l.b16 %v331
        %v464 = vunpack.c.l.b16 %v332
        %v465 = vunpack.c.l.b16 %v333
        %v466 = vunpack.c.l.b16 %v334
        %v467 = vunpack.c.l.b16 %v335
        %v468 = vunpack.c.l.b16 %v336
        %v469 = vunpack.c.l.b16 %v337
        %v470 = vunpack.c.l.b16 %v338
        %v471 = vunpack.c.l.b16 %v339
        %v472 = vunpack.c.l.b16 %v340
        %v473 = vunpack.c.l.b16 %v341
        %v474 = vunpack.c.l.b16 %v342
        %v475 = vunpack.c.l.b16 %v343
        %v476 = vunpack.c.l.b16 %v344
        %v477 = vunpack.c.l.b16 %v345
        %v478 = vunpack.c.l.b16 %v346
        %v479 = vunpack.c.l.b16 %v347
        %v480 = vunpack.c.l.b16 %v348
        %v481 = vunpack.c.l.b16 %v349
        %v482 = vunpack.c.l.b16 %v350
        %v483 = vunpack.c.l.b16 %v351
        %v484 = vunpack.c.l.b16 %v352
        %v485 = vunpack.c.l.b16 %v353
        %v486 = vunpack.c.l.b16 %v354
        %v487 = vunpack.c.l.b16 %v355
        %v488 = vunpack.c.l.b16 %v356
        %v489 = vunpack.c.l.b16 %v357
        %v490 = vunpack.c.l.b16 %v358
        %v491 = vunpack.c.l.b16 %v359
        %v492 = vunpack.c.l.b16 %v360
        %v493 = vunpack.c.l.b16 %v361
        %v494 = vunpack.c.l.b16 %v362
        %v495 = vunpack.c.l.b16 %v363
        %v496 = vunpack.c.l.b16 %v364
        %v497 = vunpack.c.l.b16 %v365
        %v498 = vpack.c.b16 %v435, %v434
        %v499 = vpack.c.b16 %v437, %v436
        %v500 = vpack.c.b16 %v439, %v438
        %v501 = vpack.c.b16 %v441, %v440
        %v502 = vpack.c.b16 %v443, %v442
        %v503 = vpack.c.b16 %v445, %v444
        %v504 = vpack.c.b16 %v447, %v446
        %v505 = vpack.c.b16 %v449, %v448
        %v506 = vpack.c.b16 %v451, %v450
        %v507 = vpack.c.b16 %v453, %v452
        %v508 = vpack.c.b16 %v455, %v454
        %v509 = vpack.c.b16 %v457, %v456
        %v510 = vpack.c.b16 %v459, %v458
        %v511 = vpack.c.b16 %v461, %v460
        %v512 = vpack.c.b16 %v463, %v462
        %v513 = vpack.c.b16 %v465, %v464
        %v514 = vpack.c.b16 %v467, %v466
        %v515 = vpack.c.b16 %v469, %v468
        %v516 = vpack.c.b16 %v471, %v470
        %v517 = vpack.c.b16 %v473, %v472
        %v518 = vpack.c.b16 %v475, %v474
        %v519 = vpack.c.b16 %v477, %v476
        %v520 = vpack.c.b16 %v479, %v478
        %v521 = vpack.c.b16 %v481, %v480
        %v522 = vpack.c.b16 %v483, %v482
        %v523 = vpack.c.b16 %v485, %v484
        %v524 = vpack.c.b16 %v487, %v486
        %v525 = vpack.c.b16 %v489, %v488
        %v526 = vpack.c.b16 %v491, %v490
        %v527 = vpack.c.b16 %v493, %v492
        %v528 = vpack.c.b16 %v495, %v494
        %v529 = vpack.c.b16 %v497, %v496
        %562 = vmatpush.bf16.msra.mxu0 %v505
        %563 = vmatpush.bf16.msra.mxu0 %v504
        %564 = vmatpush.bf16.msra.mxu0 %v503
        %565 = vmatpush.bf16.msra.mxu0 %v502
        %566 = vmatpush.bf16.msra.mxu0 %v501
        %567 = vmatpush.bf16.msra.mxu0 %v500
        %568 = vmatpush.bf16.msra.mxu0 %v499
        %569 = vmatpush.bf16.msra.mxu0 %v498
        %570 = vmatmul.bf16.gmra.mxu0 %v294
        %v571 = vpop.f32.mrf.mxu0
        %v572 = vadd.f32 %v368, %v571
        %v573 = vpop.f32.mrf.mxu0
        %v574 = vadd.f32 %v368, %v573
        %575 = vmatmul.bf16.gmra.mxu0 %v298
        %v576 = vpop.f32.mrf.mxu0
        %v577 = vadd.f32 %v368, %v576
        %v578 = vpop.f32.mrf.mxu0
        %v579 = vadd.f32 %v368, %v578
        %580 = vdwg.mxu0
        %581 = vmatpush.bf16.msra.mxu0 %v513
        %582 = vmatpush.bf16.msra.mxu0 %v512
        %583 = vmatpush.bf16.msra.mxu0 %v511
        %584 = vmatpush.bf16.msra.mxu0 %v510
        %585 = vmatpush.bf16.msra.mxu0 %v509
        %586 = vmatpush.bf16.msra.mxu0 %v508
        %587 = vmatpush.bf16.msra.mxu0 %v507
        %588 = vmatpush.bf16.msra.mxu0 %v506
        %589 = vmatmul.bf16.gmra.mxu0 %v295
        %v590 = vpop.f32.mrf.mxu0
        %v591 = vadd.f32 %v572, %v590
        %v592 = vpop.f32.mrf.mxu0
        %v593 = vadd.f32 %v574, %v592
        %594 = vmatmul.bf16.gmra.mxu0 %v299
        %v595 = vpop.f32.mrf.mxu0
        %v596 = vadd.f32 %v577, %v595
        %v597 = vpop.f32.mrf.mxu0
        %v598 = vadd.f32 %v579, %v597
        %599 = vdwg.mxu0
        %600 = vmatpush.bf16.msra.mxu0 %v521
        %601 = vmatpush.bf16.msra.mxu0 %v520
        %602 = vmatpush.bf16.msra.mxu0 %v519
        %603 = vmatpush.bf16.msra.mxu0 %v518
        %604 = vmatpush.bf16.msra.mxu0 %v517
        %605 = vmatpush.bf16.msra.mxu0 %v516
        %606 = vmatpush.bf16.msra.mxu0 %v515
        %607 = vmatpush.bf16.msra.mxu0 %v514
        %608 = vmatmul.bf16.gmra.mxu0 %v296
        %v609 = vpop.f32.mrf.mxu0
        %v610 = vadd.f32 %v591, %v609
        %v611 = vpop.f32.mrf.mxu0
        %v612 = vadd.f32 %v593, %v611
        %613 = vmatmul.bf16.gmra.mxu0 %v300
        %v614 = vpop.f32.mrf.mxu0
        %v615 = vadd.f32 %v596, %v614
        %v616 = vpop.f32.mrf.mxu0
        %v617 = vadd.f32 %v598, %v616
        %618 = vdwg.mxu0
        %619 = vmatpush.bf16.msra.mxu0 %v529
        %620 = vmatpush.bf16.msra.mxu0 %v528
        %621 = vmatpush.bf16.msra.mxu0 %v527
        %622 = vmatpush.bf16.msra.mxu0 %v526
        %623 = vmatpush.bf16.msra.mxu0 %v525
        %624 = vmatpush.bf16.msra.mxu0 %v524
        %625 = vmatpush.bf16.msra.mxu0 %v523
        %626 = vmatpush.bf16.msra.mxu0 %v522
        %627 = vmatmul.bf16.gmra.mxu0 %v297
        %v628 = vpop.f32.mrf.mxu0
        %v629 = vadd.f32 %v610, %v628
        %v630 = vpop.f32.mrf.mxu0
        %v631 = vadd.f32 %v612, %v630
        %632 = vmatmul.bf16.gmra.mxu0 %v301
        %v633 = vpop.f32.mrf.mxu0
        %v634 = vadd.f32 %v615, %v633
        %v635 = vpop.f32.mrf.mxu0
        %v636 = vadd.f32 %v617, %v635
        %637 = vdwg.mxu0
        %v638 = vmax.f32 %v629, 0.0
        %v639 = vmax.f32 %v631, 0.0
        %v640 = vmax.f32 %v634, 0.0
        %v641 = vmax.f32 %v636, 0.0
        %v642 = vpack.c.bf16 %v639, %v638
        %v643 = vpack.c.bf16 %v641, %v640
        %v644 = vld [vmem:[%s3] sm:$0xf]
        %v645 = vld [vmem:[%s3 + $0x4] sm:$0xf]
        %v646 = vld [vmem:[%s3 + $0x8] sm:$0xf]
        %v647 = vld [vmem:[%s3 + $0xc] sm:$0xf]
        %v648 = vld [vmem:[%s3 + $0x10] sm:$0xf]
        %v649 = vld [vmem:[%s3 + $0x14] sm:$0xf]
        %v650 = vld [vmem:[%s3 + $0x18] sm:$0xf]
        %v651 = vld [vmem:[%s3 + $0x1c] sm:$0xf]
        %v652 = vld [vmem:[%s3 + $0x20] sm:$0xf]
        %v653 = vld [vmem:[%s3 + $0x24] sm:$0xf]
        %v654 = vld [vmem:[%s3 + $0x28] sm:$0xf]
        %v655 = vld [vmem:[%s3 + $0x2c] sm:$0xf]
        %v656 = vld [vmem:[%s3 + $0x30] sm:$0xf]
        %v657 = vld [vmem:[%s3 + $0x34] sm:$0xf]
        %v658 = vld [vmem:[%s3 + $0x38] sm:$0xf]
        %v659 = vld [vmem:[%s3 + $0x3c] sm:$0xf]
        %v660 = vld [vmem:[%s4] sm:$0x1]
        %v662 = vperm.slane %v660, 0
        %v680 = vunpack.c.l.b16 %v644
        %v681 = vunpack.c.l.b16 %v645
        %v682 = vunpack.c.l.b16 %v646
        %v683 = vunpack.c.l.b16 %v647
        %v684 = vunpack.c.l.b16 %v648
        %v685 = vunpack.c.l.b16 %v649
        %v686 = vunpack.c.l.b16 %v650
        %v687 = vunpack.c.l.b16 %v651
        %v688 = vunpack.c.l.b16 %v652
        %v689 = vunpack.c.l.b16 %v653
        %v690 = vunpack.c.l.b16 %v654
        %v691 = vunpack.c.l.b16 %v655
        %v692 = vunpack.c.l.b16 %v656
        %v693 = vunpack.c.l.b16 %v657
        %v694 = vunpack.c.l.b16 %v658
        %v695 = vunpack.c.l.b16 %v659
        %v696 = vpack.c.b16 %v681, %v680
        %v697 = vpack.c.b16 %v683, %v682
        %v698 = vpack.c.b16 %v685, %v684
        %v699 = vpack.c.b16 %v687, %v686
        %v700 = vpack.c.b16 %v689, %v688
        %v701 = vpack.c.b16 %v691, %v690
        %v702 = vpack.c.b16 %v693, %v692
        %v703 = vpack.c.b16 %v695, %v694
        %712 = vmatpush.bf16.msra.mxu0 %v703
        %713 = vmatpush.bf16.msra.mxu0 %v702
        %714 = vmatpush.bf16.msra.mxu0 %v701
        %715 = vmatpush.bf16.msra.mxu0 %v700
        %716 = vmatpush.bf16.msra.mxu0 %v699
        %717 = vmatpush.bf16.msra.mxu0 %v698
        %718 = vmatpush.bf16.msra.mxu0 %v697
        %719 = vmatpush.bf16.msra.mxu0 %v696
        %720 = vmatmul.bf16.gmra.mxu0 %v642
        %v721 = vpop.f32.mrf.mxu0
        %v722 = vadd.f32 %v662, %v721
        %v723 = vpop.f32.mrf.mxu0
        %v724 = vadd.f32 %v662, %v723
        %725 = vmatmul.bf16.gmra.mxu0 %v643
        %v726 = vpop.f32.mrf.mxu0
        %v727 = vadd.f32 %v662, %v726
        %v728 = vpop.f32.mrf.mxu0
        %v729 = vadd.f32 %v662, %v728
        %730 = vdwg.mxu0
        %vm731 = vcmask 244736
        %732 = vst.msk [vmem:[%s266] sm:$0xff] %vm731, %v722
        %733 = vst.msk [vmem:[%s266 + $0x8] sm:$0xff] %vm731, %v724
        %734 = vst.msk [vmem:[%s266 + $0x10] sm:$0xff] %vm731, %v727
        %735 = vst.msk [vmem:[%s266 + $0x18] sm:$0xff] %vm731, %v729
        %s736 = sand.u32 %s138, 1
        %s737 = sand.u32 %s138, 1
        %s738 = smul.addr %s737, 32
        %s739 = scalar_lea.vmem [#allocation6], %s738
        // Predicated region
        $region49: #{mlp_forward.1} parent=39 // pred_check
          %p740 = pneg %p148
        $region50: #{mlp_forward.1} parent=39 // pred_check_branch
          %742 = sbr.rel (%p740) target = $region52
        $region51: #{mlp_forward.1} parent=39 // pred_region
          %s743 = smul.u32 4, %s20
          %s744 = ssub.s32 7, %s743
          %p745 = scmp.lt.s32.totalorder %s744, 4
          %s746 = scalar_select %p745, %s744, 4
          %s747 = smul.u32 8, %s746
          %p748 = scmp.ne.s32.totalorder 0, %s747
          %s749 = smul.addr %s743, 8
          %s750 = scalar_lea.vmem %s5, %s749
          // Predicated region
          $region53: #{mlp_forward.1} parent=51 // pred_check
            %p751 = pneg %p748
          $region54: #{mlp_forward.1} parent=51 // pred_check_branch
            %753 = sbr.rel (%p751) target = $region56
          $region55: #{mlp_forward.1} parent=51 // pred_region
            // Predicated region
            $region57: #{mlp_forward.1} parent=55 // pred_check
              _
            $region58: #{mlp_forward.1} parent=55 // pred_check_branch
              %755 = sbr.rel (0) target = $region60
            $region59: #{mlp_forward.1} parent=55 // pred_region
              // Predicated region
              $region79: #{mlp_forward.1} parent=59 // pred_check
                _
              $region80: #{mlp_forward.1} parent=59 // pred_check_branch
                %811 = sbr.rel (0) target = $region82
              $region81: #{mlp_forward.1} parent=59 // pred_region
                %s812 = sshrl.u32 %s746, 2
                // While loop
                $region83: #{mlp_forward.1} parent=81 // loop_pre_header
                  _
                $region84: #{mlp_forward.1} parent=81 // loop_header
                  %s814 = sphi 0, %s816
                  %p815 = scmp.ge.s32.totalorder %s814, %s812
                  %s819 = sphi 0, %s832
                  %s820 = sphi %s739, %s835
                  %s821 = sphi %s750, %s836
                $region85: #{mlp_forward.1} parent=81 // loop_header_branch
                  %818 = sbr.rel (%p815) target = $region89
                $region86: #{mlp_forward.1} parent=81 // loop_body
                  %v822 = vld [vmem:[%s820] sm:$0xff]
                  %823 = vst [vmem:[%s821] sm:$0xff] %v822
                  %v824 = vld [vmem:[%s820 + $0x8] sm:$0xff]
                  %825 = vst [vmem:[%s821 + $0x8] sm:$0xff] %v824
                  %v826 = vld [vmem:[%s820 + $0x10] sm:$0xff]
                  %827 = vst [vmem:[%s821 + $0x10] sm:$0xff] %v826
                  %v828 = vld [vmem:[%s820 + $0x18] sm:$0xff]
                  %829 = vst [vmem:[%s821 + $0x18] sm:$0xff] %v828
                  %s830 = sadd.s32 1, %s819
                  %p831 = scmp.ge.s32.totalorder %s830, %s812
                  %s832 = scalar_select %p831, 0, %s830
                  %s833 = smul.u32 %s832, 32
                  %s834 = smul.u32 %s832, 32
                  %s835 = scalar_lea.vmem %s739, %s833 [#allocation6]
                  %s836 = scalar_lea.vmem %s750, %s834
                $region87: #{mlp_forward.1} parent=81 // loop_footer
                  %s816 = sadd.s32 %s814, 1
                $region88: #{mlp_forward.1} parent=81 // loop_footer_branch
                  %813 = sbr.rel target = $region84
                $region89: #{mlp_forward.1} parent=81 // loop_exit
                  _
                %s837 = sshrl.u32 %s746, 2
                %s838 = sand.u32 %s746, 3
                %s839 = smul.u32 %s837, 4
                %s840 = smul.u32 8, %s839
                %s841 = scalar_lea.vmem %s739, %s840 [#allocation6]
                %s842 = smul.u32 8, %s839
                %s843 = scalar_lea.vmem %s750, %s842
                // While loop
                $region90: #{mlp_forward.1} parent=81 // loop_pre_header
                  _
                $region91: #{mlp_forward.1} parent=81 // loop_header
                  %s845 = sphi 0, %s847
                  %p846 = scmp.ge.s32.totalorder %s845, %s838
                  %s850 = sphi 0, %s857
                  %s851 = sphi %s841, %s860
                  %s852 = sphi %s843, %s861
                $region92: #{mlp_forward.1} parent=81 // loop_header_branch
                  %849 = sbr.rel (%p846) target = $region96
                $region93: #{mlp_forward.1} parent=81 // loop_body
                  %v853 = vld [vmem:[%s851] sm:$0xff]
                  %854 = vst [vmem:[%s852] sm:$0xff] %v853
                  %s855 = sadd.s32 1, %s850
                  %p856 = scmp.ge.s32.totalorder %s855, %s838
                  %s857 = scalar_select %p856, 0, %s855
                  %s858 = smul.u32 %s857, 8
                  %s859 = smul.u32 %s857, 8
                  %s860 = scalar_lea.vmem %s841, %s858 [#allocation6]
                  %s861 = scalar_lea.vmem %s843, %s859
                $region94: #{mlp_forward.1} parent=81 // loop_footer
                  %s847 = sadd.s32 %s845, 1
                $region95: #{mlp_forward.1} parent=81 // loop_footer_branch
                  %844 = sbr.rel target = $region91
                $region96: #{mlp_forward.1} parent=81 // loop_exit
                  _
              $region82: #{mlp_forward.1} parent=59 // pred_fallthru
                _
              // Predicated region
              $region97: #{mlp_forward.1} parent=59 // pred_check
                _
              $region98: #{mlp_forward.1} parent=59 // pred_check_branch
                %863 = sbr.rel target = $region100
              $region99: #{mlp_forward.1} parent=59 // pred_region
                _
              $region100: #{mlp_forward.1} parent=59 // pred_fallthru
                _
            $region60: #{mlp_forward.1} parent=55 // pred_fallthru
              _
            // Predicated region
            $region61: #{mlp_forward.1} parent=55 // pred_check
              _
            $region62: #{mlp_forward.1} parent=55 // pred_check_branch
              %757 = sbr.rel target = $region64
            $region63: #{mlp_forward.1} parent=55 // pred_region
              %s759 = ssub.s32 256, 1
              %s760 = sshrl.u32 %s746, 2
              // While loop
              $region65: #{mlp_forward.1} parent=63 // loop_pre_header
                _
              $region66: #{mlp_forward.1} parent=63 // loop_header
                %s762 = sphi 0, %s764
                %p763 = scmp.ge.s32.totalorder %s762, %s760
                %s767 = sphi 0, %s780
                %s768 = sphi %s739, %s783
                %s769 = sphi %s750, %s784
              $region67: #{mlp_forward.1} parent=63 // loop_header_branch
                %766 = sbr.rel (%p763) target = $region71
              $region68: #{mlp_forward.1} parent=63 // loop_body
                %v770 = vld [vmem:[%s768] sm:%s759]
                %771 = vst [vmem:[%s769] sm:%s759] %v770
                %v772 = vld [vmem:[%s768 + $0x8] sm:%s759]
                %773 = vst [vmem:[%s769 + $0x8] sm:%s759] %v772
                %v774 = vld [vmem:[%s768 + $0x10] sm:%s759]
                %775 = vst [vmem:[%s769 + $0x10] sm:%s759] %v774
                %v776 = vld [vmem:[%s768 + $0x18] sm:%s759]
                %777 = vst [vmem:[%s769 + $0x18] sm:%s759] %v776
                %s778 = sadd.s32 1, %s767
                %p779 = scmp.ge.s32.totalorder %s778, %s760
                %s780 = scalar_select %p779, 0, %s778
                %s781 = smul.u32 %s780, 32
                %s782 = smul.u32 %s780, 32
                %s783 = scalar_lea.vmem %s739, %s781 [#allocation6]
                %s784 = scalar_lea.vmem %s750, %s782
              $region69: #{mlp_forward.1} parent=63 // loop_footer
                %s764 = sadd.s32 %s762, 1
              $region70: #{mlp_forward.1} parent=63 // loop_footer_branch
                %761 = sbr.rel target = $region66
              $region71: #{mlp_forward.1} parent=63 // loop_exit
                _
              %s785 = sshrl.u32 %s746, 2
              %s786 = sand.u32 %s746, 3
              %s787 = smul.u32 %s785, 4
              %s788 = smul.u32 8, %s787
              %s789 = scalar_lea.vmem %s739, %s788 [#allocation6]
              %s790 = smul.u32 8, %s787
              %s791 = scalar_lea.vmem %s750, %s790
              // While loop
              $region72: #{mlp_forward.1} parent=63 // loop_pre_header
                _
              $region73: #{mlp_forward.1} parent=63 // loop_header
                %s793 = sphi 0, %s795
                %p794 = scmp.ge.s32.totalorder %s793, %s786
                %s798 = sphi 0, %s805
                %s799 = sphi %s789, %s808
                %s800 = sphi %s791, %s809
              $region74: #{mlp_forward.1} parent=63 // loop_header_branch
                %797 = sbr.rel (%p794) target = $region78
              $region75: #{mlp_forward.1} parent=63 // loop_body
                %v801 = vld [vmem:[%s799] sm:%s759]
                %802 = vst [vmem:[%s800] sm:%s759] %v801
                %s803 = sadd.s32 1, %s798
                %p804 = scmp.ge.s32.totalorder %s803, %s786
                %s805 = scalar_select %p804, 0, %s803
                %s806 = smul.u32 %s805, 8
                %s807 = smul.u32 %s805, 8
                %s808 = scalar_lea.vmem %s789, %s806 [#allocation6]
                %s809 = scalar_lea.vmem %s791, %s807
              $region76: #{mlp_forward.1} parent=63 // loop_footer
                %s795 = sadd.s32 %s793, 1
              $region77: #{mlp_forward.1} parent=63 // loop_footer_branch
                %792 = sbr.rel target = $region73
              $region78: #{mlp_forward.1} parent=63 // loop_exit
                _
            $region64: #{mlp_forward.1} parent=55 // pred_fallthru
              _
          $region56: #{mlp_forward.1} parent=51 // pred_fallthru
            _
          %864 = vnop
        $region52: #{mlp_forward.1} parent=39 // pred_fallthru
          _
      $region40: #{mlp_forward.1} parent=5 // pred_fallthru
        _
      %p865 = scmp.le.s32.totalorder 2, %s15
      // Predicated region
      $region101: #{mlp_forward.1} parent=5 // pred_check
        %p866 = pneg %p865
      $region102: #{mlp_forward.1} parent=5 // pred_check_branch
        %868 = sbr.rel (%p866) target = $region104
      $region103: #{mlp_forward.1} parent=5 // pred_region
        %s869 = ssub.s32 %s15, 2
        // Predicated region
        $region105: #{mlp_forward.1} parent=103 // pred_check
          %p870 = pneg %p154
        $region106: #{mlp_forward.1} parent=103 // pred_check_branch
          %872 = sbr.rel (%p870) target = $region108
        $region107: #{mlp_forward.1} parent=103 // pred_region
          %s873 = sand.u32 %s139, 1
          %s874 = sand.u32 %s139, 1
          %s875 = smul.addr %s874, 32
          %s876 = scalar_lea.vmem [#allocation6], %s875
        $region108: #{mlp_forward.1} parent=103 // pred_fallthru
          _
      $region104: #{mlp_forward.1} parent=5 // pred_fallthru
        _
    $region6: #{mlp_forward.1} parent=1 // loop_footer
      %s19 = sadd.s32 1, %s15
    $region7: #{mlp_forward.1} parent=1 // loop_footer_branch
      %14 = sbr.rel target = $region3
    $region8: #{mlp_forward.1} parent=1 // loop_exit
      _
    %877 = vsyncpa [#allocation3], 1
    %s878 = scalar_lea.sflag [#allocation3], 1
    %879 = vsyncpa %s878, 1
    %880 = vsyncpa [#allocation5], 1

</llo_original>
